<compile_context>
chip_gen: v5e
topology: v5e:2x2
jax: 0.10.0
libtpu: 0.0.40
codegen_flags: <defaults>
</compile_context>

<pallas_src>
import functools

import jax
import jax.numpy as jnp
from jax import lax
from jax.experimental import pallas as pl
from jax.experimental.pallas import tpu as pltpu

INPUT_SIZE = 8
HIDDEN_SIZES = (32, 32, 32)
_LANE = 128


def _cdiv(a, b):
    return -(-a // b)


def _round_up(n, m):
    return ((n + m - 1) // m) * m


def _choose_tile(batch, batch_tile):
    """Batch-tile (lane) width: big tiles, but >= 2 grid steps when possible."""
    if batch <= _LANE:
        return batch                      # single full block (equals full dim)
    half = _round_up(_cdiv(batch, 2), _LANE)
    return max(_LANE, min(batch_tile, half))


def _mlp_kernel(x_ref, w23_ref, pf_ref, o_ref):
    """Fused MLP forward for one batch tile.

    x_ref:   (tile, 8)  f32   -- natural PyTorch input layout
    w23_ref: (64, 32)   bf16  -- rows 0:32 = w2, rows 32:64 = w3 (out, in)
    pf_ref:  (32, 16)   f32   -- cols 0:8 = w1, 8 = b1, 9 = b2, 10 = b3,
                                 11 = w4^T, [0,12] = b4
    o_ref:   (1, tile)  f32   -- batch on the lane axis (lane-dense stores)
    """
    pf = pf_ref[...]                       # (32, 16) f32, resident
    w23 = w23_ref[...]                     # (64, 32) bf16, resident

    w1 = pf[:, 0:8]                        # (32, 8)  f32
    b1 = pf[:, 8:9]                        # (32, 1)
    b2 = pf[:, 9:10]
    b3 = pf[:, 10:11]
    w4t = pf[:, 11:12]                     # (32, 1)
    b4 = pf[0:1, 12:13]                    # (1, 1)
    w2 = w23[0:32, :]                      # (32, 32) bf16
    w3 = w23[32:64, :]                     # (32, 32) bf16

    # Layer 1 (f32): contract the feature axis of the natural (tile, 8) block
    # directly -> (32, tile); batch lands on the lane axis for the whole net.
    h = lax.dot_general(
        w1, x_ref[...],
        dimension_numbers=(((1,), (1,)), ((), ())),
        preferred_element_type=jnp.float32) + b1                 # (32, tile)
    h = jnp.maximum(h, 0.0)

    # Layers 2-3: bf16 MXU inputs, f32 accumulation, f32 bias/ReLU.
    h = jnp.dot(w2, h.astype(jnp.bfloat16),
                preferred_element_type=jnp.float32) + b2
    h = jnp.maximum(h, 0.0)

    h = jnp.dot(w3, h.astype(jnp.bfloat16),
                preferred_element_type=jnp.float32) + b3
    h = jnp.maximum(h, 0.0)

    # Final 32 -> 1 layer: VPU broadcast-multiply + XLU sublane reduction.
    z = jnp.sum(w4t * h, axis=0, keepdims=True) + b4             # (1, tile)

    # Sigmoid with the divide on the EUP (exp is EUP too).
    o_ref[...] = pl.reciprocal(1.0 + jnp.exp(-z), approx=True)


def pack_params(params):
    """Pack the PyTorch-layout parameters into the two kernel slabs (once)."""
    w23 = jnp.concatenate(
        [params["w2"], params["w3"]], axis=0).astype(jnp.bfloat16)   # (64, 32)
    pf = jnp.zeros((HIDDEN_SIZES[0], 16), jnp.float32)
    pf = pf.at[:, 0:INPUT_SIZE].set(params["w1"].astype(jnp.float32))
    pf = pf.at[:, 8].set(params["b1"].astype(jnp.float32))
    pf = pf.at[:, 9].set(params["b2"].astype(jnp.float32))
    pf = pf.at[:, 10].set(params["b3"].astype(jnp.float32))
    pf = pf.at[:, 11].set(params["w4"].reshape(-1).astype(jnp.float32))
    pf = pf.at[0, 12].set(params["b4"].reshape(()).astype(jnp.float32))
    return w23, pf


@functools.partial(jax.jit, static_argnames=("batch_tile",))
def mlp_rom_forward(x, w23, pf, *, batch_tile=4096):
    """MLPROMClassifier forward pass (== torch forward()) via one Pallas call.

    Args:
      x: (B, 8) float32 input, untouched by the wrapper (no extra HBM passes).
      w23, pf: packed parameter slabs from pack_params().
      batch_tile: max rows of x per grid step (multiple of 128; default 4096).

    Returns:
      (B, 1) float32 sigmoid probabilities.
    """
    B, D = x.shape
    assert D == INPUT_SIZE
    assert batch_tile % _LANE == 0
    if x.dtype != jnp.float32:
        x = x.astype(jnp.float32)

    tile = _choose_tile(B, batch_tile)
    grid = _cdiv(B, tile)

    out = pl.pallas_call(
        _mlp_kernel,
        out_shape=jax.ShapeDtypeStruct((1, B), jnp.float32),
        grid_spec=pl.GridSpec(
            grid=(grid,),
            in_specs=[
                pl.BlockSpec((tile, INPUT_SIZE), lambda i: (i, 0)),  # x tile
                pl.BlockSpec(w23.shape, lambda i: (0, 0)),           # resident
                pl.BlockSpec(pf.shape, lambda i: (0, 0)),            # resident
            ],
            out_specs=pl.BlockSpec((1, tile), lambda i: (0, i)),
        ),
        compiler_params=pltpu.CompilerParams(
            dimension_semantics=("parallel",),
        ),
    )(x, w23, pf)

    return out.reshape(B, 1)                 # free: (1, B) -> (B, 1) contiguous


def init_params(key):
    """Deterministic init matching torch.nn.Linear defaults (PyTorch layout)."""
    sizes = [INPUT_SIZE, *HIDDEN_SIZES, 1]
    params = {}
    for idx in range(len(sizes) - 1):
        fan_in, fan_out = sizes[idx], sizes[idx + 1]
        key, kw, kb = jax.random.split(key, 3)
        bound = 1.0 / jnp.sqrt(jnp.float32(fan_in))
        params[f"w{idx + 1}"] = jax.random.uniform(
            kw, (fan_out, fan_in), jnp.float32, minval=-bound, maxval=bound)
        params[f"b{idx + 1}"] = jax.random.uniform(
            kb, (fan_out,), jnp.float32, minval=-bound, maxval=bound)
    return params


def reference_forward(x, params):
    """Pure-JAX f32 reference (same math as the PyTorch nn.Sequential)."""
    h = x
    h = jnp.maximum(h @ params["w1"].T + params["b1"], 0.0)
    h = jnp.maximum(h @ params["w2"].T + params["b2"], 0.0)
    h = jnp.maximum(h @ params["w3"].T + params["b3"], 0.0)
    z = h @ params["w4"].T + params["b4"]
    return jax.nn.sigmoid(z)


# TODO(synk): the module's load() (torch.load of a checkpoint) is host-side
# file I/O with no Pallas equivalent; parameters are generated in-script.

if __name__ == "__main__":
    key = jax.random.PRNGKey(0)
    key, kx = jax.random.split(key)
    params = init_params(key)
    w23, pf = pack_params(params)

    # Small demo batch: single full block (block shapes equal full dims).
    B = 16
    x = jax.random.normal(kx, (B, INPUT_SIZE), jnp.float32)
    out = jax.block_until_ready(mlp_rom_forward(x, w23, pf))
    ref = reference_forward(x, params)
    assert out.shape == (B, 1), out.shape
    err = float(jnp.max(jnp.abs(out - ref)))
    assert err < 2e-2, f"max abs err = {err}"

    # Non-tile-aligned batch: 2-step parallel grid with a partial last block.
    B2 = 300
    x2 = jax.random.normal(jax.random.PRNGKey(1), (B2, INPUT_SIZE), jnp.float32)
    out2 = jax.block_until_ready(mlp_rom_forward(x2, w23, pf, batch_tile=256))
    ref2 = reference_forward(x2, params)
    assert out2.shape == (B2, 1), out2.shape
    err2 = float(jnp.max(jnp.abs(out2 - ref2)))
    assert err2 < 2e-2, f"max abs err = {err2}"

    # Larger batch exercising the default big-tile path (tile=1024, 2 steps).
    B3 = 2000
    x3 = jax.random.normal(jax.random.PRNGKey(2), (B3, INPUT_SIZE), jnp.float32)
    out3 = jax.block_until_ready(mlp_rom_forward(x3, w23, pf))
    ref3 = reference_forward(x3, params)
    assert out3.shape == (B3, 1), out3.shape
    err3 = float(jnp.max(jnp.abs(out3 - ref3)))
    assert err3 < 2e-2, f"max abs err = {err3}"

    # classify() equivalent (classification_offset = 0.0):
    _ = jnp.squeeze(jnp.round(out + 0.0))

    print("KERNEL_OK")
</pallas_src>

<mosaic_0001>
module attributes {stable_mosaic.version = 11 : i64} {
  func.func @_mlp_kernel(%arg0: i32, %arg1: memref<16x8xf32, #tpu.memory_space<vmem>>, %arg2: memref<64x32xbf16, #tpu.memory_space<vmem>>, %arg3: memref<32x16xf32, #tpu.memory_space<vmem>>, %arg4: memref<1x16xf32, #tpu.memory_space<vmem>>) attributes {dimension_semantics = [#tpu.dimension_semantics<parallel>], iteration_bounds = array<i64: 1>, scalar_prefetch = 0 : i64, scratch_operands = 0 : i64, tpu.core_type = #tpu.core_type<tc>, window_params = [{transform_indices = @transform_0, window_bounds = array<i64: 16, 8>}, {pipeline_mode = #tpu.pipeline_mode<synchronous>, transform_indices = @transform_1, window_bounds = array<i64: 64, 32>}, {pipeline_mode = #tpu.pipeline_mode<synchronous>, transform_indices = @transform_2, window_bounds = array<i64: 32, 16>}, {transform_indices = @transform_3, window_bounds = array<i64: 1, 16>}]} {
    %c0 = arith.constant 0 : index
    %c0_0 = arith.constant 0 : index
    %0 = vector.load %arg3[%c0, %c0_0] : memref<32x16xf32, #tpu.memory_space<vmem>>, vector<32x16xf32>
    %c0_1 = arith.constant 0 : index
    %c0_2 = arith.constant 0 : index
    %1 = vector.load %arg2[%c0_1, %c0_2] : memref<64x32xbf16, #tpu.memory_space<vmem>>, vector<64x32xbf16>
    %2 = vector.extract_strided_slice %0 {offsets = [0, 0], sizes = [32, 8], strides = [1, 1]} : vector<32x16xf32> to vector<32x8xf32>
    %3 = vector.extract_strided_slice %0 {offsets = [0, 8], sizes = [32, 1], strides = [1, 1]} : vector<32x16xf32> to vector<32x1xf32>
    %4 = vector.extract_strided_slice %0 {offsets = [0, 9], sizes = [32, 1], strides = [1, 1]} : vector<32x16xf32> to vector<32x1xf32>
    %5 = vector.extract_strided_slice %0 {offsets = [0, 10], sizes = [32, 1], strides = [1, 1]} : vector<32x16xf32> to vector<32x1xf32>
    %6 = vector.extract_strided_slice %0 {offsets = [0, 11], sizes = [32, 1], strides = [1, 1]} : vector<32x16xf32> to vector<32x1xf32>
    %7 = vector.extract_strided_slice %0 {offsets = [0, 12], sizes = [1, 1], strides = [1, 1]} : vector<32x16xf32> to vector<1x1xf32>
    %8 = vector.extract_strided_slice %1 {offsets = [0, 0], sizes = [32, 32], strides = [1, 1]} : vector<64x32xbf16> to vector<32x32xbf16>
    %9 = vector.extract_strided_slice %1 {offsets = [32, 0], sizes = [32, 32], strides = [1, 1]} : vector<64x32xbf16> to vector<32x32xbf16>
    %c0_3 = arith.constant 0 : index
    %c0_4 = arith.constant 0 : index
    %10 = vector.load %arg1[%c0_3, %c0_4] : memref<16x8xf32, #tpu.memory_space<vmem>>, vector<16x8xf32>
    %cst = arith.constant dense<0.000000e+00> : vector<32x16xf32>
    %11 = tpu.matmul %2, %10, %cst {dimension_numbers = #tpu.dot_dimension_numbers<[1], [1], [0], [0], [0, 0, 1, 0], [], []>} : vector<32x8xf32>, vector<16x8xf32>, vector<32x16xf32> -> vector<32x16xf32>
    %12 = vector.broadcast %3 : vector<32x1xf32> to vector<32x16xf32>
    %13 = arith.addf %11, %12 : vector<32x16xf32>
    %cst_5 = arith.constant 0.000000e+00 : f32
    %14 = vector.broadcast %cst_5 : f32 to vector<32x16xf32>
    %15 = arith.maximumf %13, %14 : vector<32x16xf32>
    %16 = arith.truncf %15 : vector<32x16xf32> to vector<32x16xbf16>
    %cst_6 = arith.constant dense<0.000000e+00> : vector<32x16xf32>
    %17 = tpu.matmul %8, %16, %cst_6 {dimension_numbers = #tpu.dot_dimension_numbers<[1], [0], [0], [1], [0, 0, 1, 1], [], []>} : vector<32x32xbf16>, vector<32x16xbf16>, vector<32x16xf32> -> vector<32x16xf32>
    %18 = vector.broadcast %4 : vector<32x1xf32> to vector<32x16xf32>
    %19 = arith.addf %17, %18 : vector<32x16xf32>
    %cst_7 = arith.constant 0.000000e+00 : f32
    %20 = vector.broadcast %cst_7 : f32 to vector<32x16xf32>
    %21 = arith.maximumf %19, %20 : vector<32x16xf32>
    %22 = arith.truncf %21 : vector<32x16xf32> to vector<32x16xbf16>
    %cst_8 = arith.constant dense<0.000000e+00> : vector<32x16xf32>
    %23 = tpu.matmul %9, %22, %cst_8 {dimension_numbers = #tpu.dot_dimension_numbers<[1], [0], [0], [1], [0, 0, 1, 1], [], []>} : vector<32x32xbf16>, vector<32x16xbf16>, vector<32x16xf32> -> vector<32x16xf32>
    %24 = vector.broadcast %5 : vector<32x1xf32> to vector<32x16xf32>
    %25 = arith.addf %23, %24 : vector<32x16xf32>
    %cst_9 = arith.constant 0.000000e+00 : f32
    %26 = vector.broadcast %cst_9 : f32 to vector<32x16xf32>
    %27 = arith.maximumf %25, %26 : vector<32x16xf32>
    %28 = vector.broadcast %6 : vector<32x1xf32> to vector<32x16xf32>
    %29 = arith.mulf %28, %27 : vector<32x16xf32>
    %cst_10 = arith.constant dense<0.000000e+00> : vector<16xf32>
    %30 = vector.multi_reduction <add>, %29, %cst_10 [0] : vector<32x16xf32> to vector<16xf32>
    %31 = vector.shape_cast %30 : vector<16xf32> to vector<1x16xf32>
    %32 = vector.broadcast %7 : vector<1x1xf32> to vector<1x16xf32>
    %33 = arith.addf %31, %32 : vector<1x16xf32>
    %cst_11 = arith.constant 0.000000e+00 : f32
    %34 = vector.broadcast %cst_11 : f32 to vector<1x16xf32>
    %35 = arith.subf %34, %33 : vector<1x16xf32>
    %36 = math.exp %35 : vector<1x16xf32>
    %cst_12 = arith.constant 1.000000e+00 : f32
    %37 = vector.broadcast %cst_12 : f32 to vector<1x16xf32>
    %38 = arith.addf %37, %36 : vector<1x16xf32>
    %39 = tpu.reciprocal %38 {approx = true} : vector<1x16xf32> -> vector<1x16xf32>
    %c0_13 = arith.constant 0 : index
    %c0_14 = arith.constant 0 : index
    %40 = vector.load %arg4[%c0_13, %c0_14] : memref<1x16xf32, #tpu.memory_space<vmem>>, vector<1x16xf32>
    tpu.vector_store %arg4[%c0_13, %c0_14], %39 {strides = array<i32>} : memref<1x16xf32, #tpu.memory_space<vmem>>, vector<1x16xf32>,
    return
  }
  func.func @transform_0(%arg0: i32) -> (i32, i32) {
    %c0_i32 = arith.constant 0 : i32
    %c0_i32_0 = arith.constant 0 : i32
    return %arg0, %c0_i32 : i32, i32
  }
  func.func @transform_1(%arg0: i32) -> (i32, i32) {
    %c0_i32 = arith.constant 0 : i32
    %c0_i32_0 = arith.constant 0 : i32
    %c0_i32_1 = arith.constant 0 : i32
    return %c0_i32, %c0_i32_0 : i32, i32
  }
  func.func @transform_2(%arg0: i32) -> (i32, i32) {
    %c0_i32 = arith.constant 0 : i32
    %c0_i32_0 = arith.constant 0 : i32
    %c0_i32_1 = arith.constant 0 : i32
    return %c0_i32, %c0_i32_0 : i32, i32
  }
  func.func @transform_3(%arg0: i32) -> (i32, i32) {
    %c0_i32 = arith.constant 0 : i32
    %c0_i32_0 = arith.constant 0 : i32
    return %c0_i32, %arg0 : i32, i32
  }
}

</mosaic_0001>

<llo_original>
// kernel: mlp_rom_forward.1
$region0: #{mlp_rom_forward.1}
  #allocation0 [shape = 'u32[]', space=smem, size = 0x4, offset = 0x4, fixed_abs, tag = 'smem constant byte address 0x4 - core index']
  #allocation1 [shape = 'u32[72,128]{1,0:T(1,128)}', space=vmem, size = 0x9000, scoped, tag = 'internal scratch']
  %s0 = inlined_call_operand.vmem [shape: f32[16,8], index: 0, kind: input, shape index: {}]
  %s1 = inlined_call_operand.vmem [shape: bf16[64,32], index: 1, kind: input, shape index: {}]
  %s2 = inlined_call_operand.vmem [shape: f32[32,16], index: 2, kind: input, shape index: {}]
  %s3 = inlined_call_operand.hbm [shape: f32[1,16], index: 3, kind: output, shape index: {}]
  %s4 = sld [smem:[#allocation0]]
  $region22: #{mlp_rom_forward.1} parent=0
    _
  %s6 = ssub.s32 1, %s4
  %s7 = scalar_select 0, %s6, %s4
  $region1: #{mlp_rom_forward.1} parent=0
    #allocation2 [shape = 'u8[512]{0}', space=vmem, size = 0x400, scoped, tag = 'output window, operand 0, single buffered']
    #allocation3 [shape = 's32[1]{0}', space=sflag, size = 0x4, scoped, tag = 'scoped memory for mlp_rom_forward.1']
    %8 = vsyncpa [#allocation3], 0
    // Predicated region
    $region2: #{mlp_rom_forward.1} parent=1 // pred_check
      _
    $region3: #{mlp_rom_forward.1} parent=1 // pred_check_branch
      %10 = sbr.rel (0) target = $region5
    $region4: #{mlp_rom_forward.1} parent=1 // pred_region
      _
    $region5: #{mlp_rom_forward.1} parent=1 // pred_fallthru
      _
    // Predicated region
    $region6: #{mlp_rom_forward.1} parent=1 // pred_check
      _
    $region7: #{mlp_rom_forward.1} parent=1 // pred_check_branch
      %12 = sbr.rel (0) target = $region9
    $region8: #{mlp_rom_forward.1} parent=1 // pred_region
      _
    $region9: #{mlp_rom_forward.1} parent=1 // pred_fallthru
      _
    // Predicated region
    $region10: #{mlp_rom_forward.1} parent=1 // pred_check
      _
    $region11: #{mlp_rom_forward.1} parent=1 // pred_check_branch
      %14 = sbr.rel (0) target = $region13
    $region12: #{mlp_rom_forward.1} parent=1 // pred_region
      _
    $region13: #{mlp_rom_forward.1} parent=1 // pred_fallthru
      _
    %v16 = vld [vmem:[%s2] sm:$0xff]
    %v17 = vld [vmem:[%s2 + $0x8] sm:$0xff]
    %v18 = vld [vmem:[%s2 + $0x10] sm:$0xff]
    %v19 = vld [vmem:[%s2 + $0x18] sm:$0xff]
    %v20 = vld [vmem:[%s1] sm:$0xf]
    %v21 = vld [vmem:[%s1 + $0x4] sm:$0xf]
    %v22 = vld [vmem:[%s1 + $0x8] sm:$0xf]
    %v23 = vld [vmem:[%s1 + $0xc] sm:$0xf]
    %v24 = vld [vmem:[%s1 + $0x10] sm:$0xf]
    %v25 = vld [vmem:[%s1 + $0x14] sm:$0xf]
    %v26 = vld [vmem:[%s1 + $0x18] sm:$0xf]
    %v27 = vld [vmem:[%s1 + $0x1c] sm:$0xf]
    %v28 = vld [vmem:[%s0] sm:$0xff]
    %v29 = vld [vmem:[%s0 + $0x8] sm:$0xff]
    %31 = vset.pattern.permute.xlu0 8
    %32 = vperm.xlu0 %31, %v16
    %v33 = vpop.permute.xlu0 %32
    %36 = vset.pattern.permute.xlu0 8
    %37 = vperm.xlu0 %36, %v17
    %v38 = vpop.permute.xlu0 %37
    %41 = vset.pattern.permute.xlu0 8
    %42 = vperm.xlu0 %41, %v18
    %v43 = vpop.permute.xlu0 %42
    %46 = vset.pattern.permute.xlu0 8
    %47 = vperm.xlu0 %46, %v19
    %v48 = vpop.permute.xlu0 %47
    %vm50 = vcmask 64512
    %v51 = vsel %vm50, %v16, 0
    %v53 = vsel %vm50, %v17, 0
    %v55 = vsel %vm50, %v18, 0
    %v57 = vsel %vm50, %v19, 0
    %v60 = vsel %vm50, %v28, 0
    %v63 = vsel %vm50, %v29, 0
    %65 = vmatpush.xpose.msra.mxu0 0.0
    %66 = vmatpush.xpose.msra.mxu0 0.0
    %67 = vmatpush.xpose.msra.mxu0 0.0
    %68 = vmatpush.xpose.msra.mxu0 0.0
    %69 = vmatpush.xpose.msra.mxu0 0.0
    %70 = vmatpush.xpose.msra.mxu0 0.0
    %71 = vmatpush.xpose.msra.mxu0 0.0
    %72 = vmatpush.xpose.msra.mxu0 0.0
    %73 = vmatpush.xpose.msra.mxu0 0.0
    %74 = vmatpush.xpose.msra.mxu0 0.0
    %75 = vmatpush.xpose.msra.mxu0 0.0
    %76 = vmatpush.xpose.msra.mxu0 0.0
    %77 = vmatpush.xpose.msra.mxu0 0.0
    %78 = vmatpush.xpose.msra.mxu0 0.0
    %79 = vmatpush.xpose.msra.mxu0 %v63
    %80 = vmatpush.xpose.msra.mxu0 %v60
    %81 = vmatmul.f32.gmra.mxu0 %v51
    %v82 = vpop.f32.mrf.mxu0
    %v83 = vadd.f32 %v33, %v82
    %84 = vmatmul.f32.gmra.mxu0 %v53
    %v85 = vpop.f32.mrf.mxu0
    %v86 = vadd.f32 %v38, %v85
    %87 = vmatmul.f32.gmra.mxu0 %v55
    %v88 = vpop.f32.mrf.mxu0
    %v89 = vadd.f32 %v43, %v88
    %90 = vmatmul.f32.gmra.mxu0 %v57
    %v91 = vpop.f32.mrf.mxu0
    %v92 = vadd.f32 %v48, %v91
    %93 = vdwg.mxu0
    %v94 = vmax.f32 %v83, 0.0
    %v95 = vmax.f32 %v86, 0.0
    %v96 = vmax.f32 %v89, 0.0
    %v97 = vmax.f32 %v92, 0.0
    %v98 = vpack.c.bf16 %v95, %v94
    %v99 = vpack.c.bf16 %v97, %v96
    %100 = vset.pattern.permute.xlu0 9
    %101 = vperm.xlu0 %100, %v16
    %v102 = vpop.permute.xlu0 %101
    %104 = vset.pattern.permute.xlu0 9
    %105 = vperm.xlu0 %104, %v17
    %v106 = vpop.permute.xlu0 %105
    %108 = vset.pattern.permute.xlu0 9
    %109 = vperm.xlu0 %108, %v18
    %v110 = vpop.permute.xlu0 %109
    %112 = vset.pattern.permute.xlu0 9
    %113 = vperm.xlu0 %112, %v19
    %v114 = vpop.permute.xlu0 %113
    %v120 = vunpack.c.l.b16 %v20
    %v121 = vunpack.c.l.b16 %v21
    %v122 = vunpack.c.l.b16 %v22
    %v123 = vunpack.c.l.b16 %v23
    %v124 = vpack.c.b16 %v121, %v120
    %v125 = vpack.c.b16 %v123, %v122
    %vm126 = vcmask 261120
    %v128 = vsel %vm126, %v124, 0
    %v131 = vsel %vm126, %v125, 0
    %133 = vmatpush.bf16.msra.mxu0 0
    %134 = vmatpush.bf16.msra.mxu0 0
    %135 = vmatpush.bf16.msra.mxu0 0
    %136 = vmatpush.bf16.msra.mxu0 0
    %137 = vmatpush.bf16.msra.mxu0 0
    %138 = vmatpush.bf16.msra.mxu0 0
    %139 = vmatpush.bf16.msra.mxu0 %v99
    %140 = vmatpush.bf16.msra.mxu0 %v98
    %141 = vmatmul.bf16.gmra.mxu0 %v128
    %v142 = vpop.f32.mrf.mxu0
    %v143 = vadd.f32 %v102, %v142
    %v144 = vpop.f32.mrf.mxu0
    %v145 = vadd.f32 %v106, %v144
    %146 = vmatmul.bf16.gmra.mxu0 %v131
    %v147 = vpop.f32.mrf.mxu0
    %v148 = vadd.f32 %v110, %v147
    %v149 = vpop.f32.mrf.mxu0
    %v150 = vadd.f32 %v114, %v149
    %151 = vdwg.mxu0
    %v152 = vmax.f32 %v143, 0.0
    %v153 = vmax.f32 %v145, 0.0
    %v154 = vmax.f32 %v148, 0.0
    %v155 = vmax.f32 %v150, 0.0
    %v156 = vpack.c.bf16 %v153, %v152
    %v157 = vpack.c.bf16 %v155, %v154
    %158 = vset.pattern.permute.xlu0 10
    %159 = vperm.xlu0 %158, %v16
    %v160 = vpop.permute.xlu0 %159
    %162 = vset.pattern.permute.xlu0 10
    %163 = vperm.xlu0 %162, %v17
    %v164 = vpop.permute.xlu0 %163
    %166 = vset.pattern.permute.xlu0 10
    %167 = vperm.xlu0 %166, %v18
    %v168 = vpop.permute.xlu0 %167
    %170 = vset.pattern.permute.xlu0 10
    %171 = vperm.xlu0 %170, %v19
    %v172 = vpop.permute.xlu0 %171
    %v178 = vunpack.c.l.b16 %v24
    %v179 = vunpack.c.l.b16 %v25
    %v180 = vunpack.c.l.b16 %v26
    %v181 = vunpack.c.l.b16 %v27
    %v182 = vpack.c.b16 %v179, %v178
    %v183 = vpack.c.b16 %v181, %v180
    %v185 = vsel %vm126, %v182, 0
    %v188 = vsel %vm126, %v183, 0
    %190 = vmatpush.bf16.msra.mxu0 0
    %191 = vmatpush.bf16.msra.mxu0 0
    %192 = vmatpush.bf16.msra.mxu0 0
    %193 = vmatpush.bf16.msra.mxu0 0
    %194 = vmatpush.bf16.msra.mxu0 0
    %195 = vmatpush.bf16.msra.mxu0 0
    %196 = vmatpush.bf16.msra.mxu0 %v157
    %197 = vmatpush.bf16.msra.mxu0 %v156
    %198 = vmatmul.bf16.gmra.mxu0 %v185
    %v199 = vpop.f32.mrf.mxu0
    %v200 = vadd.f32 %v160, %v199
    %v201 = vpop.f32.mrf.mxu0
    %v202 = vadd.f32 %v164, %v201
    %203 = vmatmul.bf16.gmra.mxu0 %v188
    %v204 = vpop.f32.mrf.mxu0
    %v205 = vadd.f32 %v168, %v204
    %v206 = vpop.f32.mrf.mxu0
    %v207 = vadd.f32 %v172, %v206
    %208 = vdwg.mxu0
    %v209 = vmax.f32 %v200, 0.0
    %v210 = vmax.f32 %v202, 0.0
    %v211 = vmax.f32 %v205, 0.0
    %v212 = vmax.f32 %v207, 0.0
    %213 = vset.pattern.permute.xlu0 11
    %214 = vperm.xlu0 %213, %v16
    %v215 = vpop.permute.xlu0 %214
    %217 = vset.pattern.permute.xlu0 11
    %218 = vperm.xlu0 %217, %v17
    %v219 = vpop.permute.xlu0 %218
    %221 = vset.pattern.permute.xlu0 11
    %222 = vperm.xlu0 %221, %v18
    %v223 = vpop.permute.xlu0 %222
    %225 = vset.pattern.permute.xlu0 11
    %226 = vperm.xlu0 %225, %v19
    %v227 = vpop.permute.xlu0 %226
    %v229 = vmul.f32 %v215, %v209
    %v230 = vmul.f32 %v219, %v210
    %v231 = vmul.f32 %v223, %v211
    %v232 = vmul.f32 %v227, %v212
    %vm233 = vcmask 130048
    %v234 = vsel %vm233, %v229, 0.0
    %v235 = vsel %vm233, %v230, 0.0
    %v236 = vadd.f32 %v234, %v235
    %v237 = vsel %vm233, %v231, 0.0
    %v238 = vadd.f32 %v236, %v237
    %v239 = vsel %vm233, %v232, 0.0
    %v240 = vadd.f32 %v238, %v239
    %v241 = vrot.slane %v240, 4
    %v242 = vadd.f32 %v240, %v241
    %v243 = vrot.slane %v242, 2
    %v244 = vadd.f32 %v242, %v243
    %v245 = vrot.slane %v244, 1
    %v246 = vadd.f32 %v244, %v245
    %247 = vset.pattern.permute.xlu0 12
    %248 = vperm.xlu0 %247, %v16
    %v249 = vpop.permute.xlu0 %248
    %v251 = vadd.f32 %v246, %v249
    %v252 = vsub.f32 0.0, %v251
    %v253 = vmul.f32 %v252, 1.442695
    %v254 = vpow.pop %v253
    %v255 = vadd.f32 %v254, 1.0
    %v256 = vrcp.pop %v255
    %vm257 = vcmask 122880
    %258 = vst.msk [vmem:[#allocation2] sm:$0x1] %vm257, %v256
    // Predicated region
    $region14: #{mlp_rom_forward.1} parent=1 // pred_check
      _
    $region15: #{mlp_rom_forward.1} parent=1 // pred_check_branch
      %260 = sbr.rel (0) target = $region17
    $region16: #{mlp_rom_forward.1} parent=1 // pred_region
      %262 = vsyncadd [#allocation3], 0
      %s264 = sshll.u32 [#allocation2], 4
      %s265 = int_to_ptr.vmem [resolvable:$true] %s264
      %s266 = sshll.u32 %s3, 4
      %s267 = int_to_ptr.hbm [resolvable:$true] %s266
      %269 = dma.vmem_to_hbm [thread:$0]  %s265, 16, %s267, [#allocation3]
    $region17: #{mlp_rom_forward.1} parent=1 // pred_fallthru
      _
    // Predicated region
    $region18: #{mlp_rom_forward.1} parent=1 // pred_check
      _
    $region19: #{mlp_rom_forward.1} parent=1 // pred_check_branch
      %271 = sbr.rel (0) target = $region21
    $region20: #{mlp_rom_forward.1} parent=1 // pred_region
      %273 = dma.done [#allocation3], 16
    $region21: #{mlp_rom_forward.1} parent=1 // pred_fallthru
      _
    %274 = vsyncpa [#allocation3], 1

</llo_original>
